<compile_context>
chip_gen: v7x
topology: tpu7x:2x2x1
jax: 0.10.0
libtpu: 0.0.40
codegen_flags: <defaults>
</compile_context>

<pallas_src>
import jax
import jax.numpy as jnp
from jax import lax
from jax.experimental import pallas as pl
from jax.experimental.pallas import tpu as pltpu


_NEG_LARGE = -1.0e30   # Python float -> inlined literal (never a captured jnp const)


def _round_up(x, m):
    return (x + m - 1) // m * m


def _vmem_capacity_bytes():
    try:
        cap = int(pltpu.get_tpu_info().vmem_capacity_bytes)
        if cap >= 16 * 2**20:
            return cap
    except Exception:
        pass
    return 64 * 2**20   # conservative default (v7x per-TensorCore VMEM)


def _vmem_need_bytes(t, d_pad, n_pad, mm_bytes, resident):
    zi = 2 * t * d_pad * mm_bytes                                   # double-buffered row block
    zj = 2 * (n_pad if resident else t) * d_pad * mm_bytes          # resident or streamed cols
    small = 5 * t * 128 * 4                                         # (t,1) scratches + out (lane pad)
    return zi + zj + small


def _choose_tile(n, mult, budget, d_pad, mm_bytes):
    """Row/col tile: <=512 rows, >=2 row blocks when possible (v7x megacore),
    minimal padding, shrunk until the streamed footprint fits the VMEM budget."""
    n_r = _round_up(max(n, mult), mult)
    if n_r <= 2 * mult:
        t = n_r
    else:
        n_blocks = max(2, -(-n // 512))
        t = _round_up(-(-n // n_blocks), mult)
    while t > mult and _vmem_need_bytes(t, d_pad, _round_up(n, t), mm_bytes, False) > budget:
        t = _round_up(max(t // 2, mult), mult)
    return t


def _make_kernel(t, n_valid, resident, needs_mask):
    def kernel(zi_ref, zj_ref, out_ref, m_ref, l_ref, d_ref):
        qi = pl.program_id(0)           # row-block axis   ("parallel")
        ki = pl.program_id(1)           # column-block axis ("arbitrary", reduction)
        nk = pl.num_programs(1)

        @pl.when(ki == 0)
        def _init():
            m_ref[...] = jnp.full_like(m_ref, _NEG_LARGE)
            l_ref[...] = jnp.zeros_like(l_ref)
            d_ref[...] = jnp.zeros_like(d_ref)

        zi = zi_ref[...]                                   # (t, d_pad), pre-normalized * 1/temp
        if resident:
            start = pl.multiple_of(ki * t, 8)
            zj = zj_ref[pl.ds(start, t), :]                # slice resident z_j
        else:
            zj = zj_ref[...]                               # streamed column block

        # logits block: contract last dims directly (no materialized z_j.T)
        s = lax.dot_general(zi, zj,
                            dimension_numbers=(((1,), (1,)), ((), ())),
                            preferred_element_type=jnp.float32)

        # diagonal term from the MXU result (only the block crossing the diagonal)
        @pl.when(ki == qi)
        def _diag():
            rr = lax.broadcasted_iota(jnp.int32, s.shape, 0)
            cc = lax.broadcasted_iota(jnp.int32, s.shape, 1)
            d_ref[...] = jnp.sum(jnp.where(rr == cc, s, 0.0), axis=-1, keepdims=True)

        # online logsumexp update; keepdims (t,1) layout throughout
        def lse_update(s_blk):
            m_old = m_ref[...]
            m_new = jnp.maximum(m_old, jnp.max(s_blk, axis=-1, keepdims=True))
            l_ref[...] = (l_ref[...] * jnp.exp(m_old - m_new)
                          + jnp.sum(jnp.exp(s_blk - m_new), axis=-1, keepdims=True))
            m_ref[...] = m_new

        if needs_mask:
            # only the FINAL column block contains padded columns -> gate the mask
            @pl.when(ki < nk - 1)
            def _():
                lse_update(s)

            @pl.when(ki == nk - 1)
            def _():
                col = ki * t + lax.broadcasted_iota(jnp.int32, s.shape, 1)
                lse_update(jnp.where(col < n_valid, s, _NEG_LARGE))
        else:
            lse_update(s)

        # finalize: per-row loss = lse - diag
        @pl.when(ki == nk - 1)
        def _fin():
            out_ref[...] = m_ref[...] + jnp.log(l_ref[...]) - d_ref[...]

    return kernel


def usp_con_loss(emb_i, emb_j, temperature=0.5, mm_dtype=None):
    n, d = emb_i.shape
    assert emb_j.shape == (n, d)

    # bf16 inputs keep bf16 MXU operands (f32 accumulation); f32 stays f32 unless overridden.
    if mm_dtype is None:
        mm_dtype = jnp.bfloat16 if emb_i.dtype == jnp.bfloat16 else jnp.float32
    mm_bytes = jnp.dtype(mm_dtype).itemsize

    # ---- tiny O(N*D) XLA prologue: normalize once, fold 1/temperature into z_i ----
    xi = emb_i.astype(jnp.float32)
    xj = emb_j.astype(jnp.float32)
    zi = xi * lax.rsqrt(jnp.maximum(jnp.sum(xi * xi, axis=-1, keepdims=True), 1e-24))
    zj = xj * lax.rsqrt(jnp.maximum(jnp.sum(xj * xj, axis=-1, keepdims=True), 1e-24))
    zi = (zi * (1.0 / float(temperature))).astype(mm_dtype)
    zj = zj.astype(mm_dtype)

    # ---- lane-dense layout & tiling ----
    d_pad = _round_up(d, 128)
    mult = 16 if mm_bytes < 4 else 8            # 16-sublane rounding for sub-32-bit dtypes
    cap = _vmem_capacity_bytes()
    budget = min(int(cap * 0.6), 80 * 2**20)    # tiling budget with headroom (v7x-safe)

    t = _choose_tile(n, mult, budget, d_pad, mm_bytes)
    n_pad = _round_up(n, t)

    if (n_pad, d_pad) != (n, d):
        pad_cfg = ((0, n_pad - n), (0, d_pad - d))
        zi = jnp.pad(zi, pad_cfg)
        zj = jnp.pad(zj, pad_cfg)

    # Keep z_j fully resident in VMEM when it fits the budget; otherwise stream blocks.
    resident = _vmem_need_bytes(t, d_pad, n_pad, mm_bytes, True) <= budget
    needs_mask = (n_pad != n)

    if resident:
        zj_spec = pl.BlockSpec((n_pad, d_pad), lambda qi, ki: (0, 0))   # DMA'd once
    else:
        zj_spec = pl.BlockSpec((t, d_pad), lambda qi, ki: (ki, 0))      # streamed per col block

    need = _vmem_need_bytes(t, d_pad, n_pad, mm_bytes, resident)
    vmem_limit = int(min(max(2 * need + 8 * 2**20, 32 * 2**20),
                         max(cap - 16 * 2**20, 32 * 2**20)))

    grid = (n_pad // t, n_pad // t)

    per_row = pl.pallas_call(
        _make_kernel(t, n, resident, needs_mask),
        out_shape=jax.ShapeDtypeStruct((n_pad, 1), jnp.float32),
        grid_spec=pltpu.PrefetchScalarGridSpec(
            num_scalar_prefetch=0,
            grid=grid,
            in_specs=[
                pl.BlockSpec((t, d_pad), lambda qi, ki: (qi, 0)),   # z_i row block
                zj_spec,                                            # z_j (resident or streamed)
            ],
            out_specs=pl.BlockSpec((t, 1), lambda qi, ki: (qi, 0)),
            scratch_shapes=[
                pltpu.VMEM((t, 1), jnp.float32),   # m : running row max
                pltpu.VMEM((t, 1), jnp.float32),   # l : running sum(exp)
                pltpu.VMEM((t, 1), jnp.float32),   # d : diag(logits) per row
            ]),
        compiler_params=pltpu.CompilerParams(
            dimension_semantics=("parallel", "arbitrary"),
            vmem_limit_bytes=vmem_limit),
    )(zi, zj)

    # Tiny epilogue: mean of per-row losses over the valid (unpadded) rows.
    return jnp.sum(per_row[:n, 0]) / n


def _reference_loss(emb_i, emb_j, temperature=0.5):
    eps = 1e-12
    zi = emb_i / jnp.maximum(jnp.linalg.norm(emb_i, axis=1, keepdims=True), eps)
    zj = emb_j / jnp.maximum(jnp.linalg.norm(emb_j, axis=1, keepdims=True), eps)
    logits = jnp.dot(zi, zj.T, precision="highest") / temperature
    idx = jnp.arange(logits.shape[0])
    lse = jax.scipy.special.logsumexp(logits, axis=-1)
    return jnp.mean(lse - logits[idx, idx])


if __name__ == "__main__":
    key = jax.random.PRNGKey(0)
    k1, k2 = jax.random.split(key)
    N, D = 8, 32  # batch of 8 embedding pairs, hidden dim 32
    emb_i = jax.random.normal(k1, (N, D), dtype=jnp.float32)
    emb_j = jax.random.normal(k2, (N, D), dtype=jnp.float32)

    loss = usp_con_loss(emb_i, emb_j, temperature=0.5)
    jax.block_until_ready(loss)

    ref = _reference_loss(emb_i, emb_j, temperature=0.5)
    # Loose-ish tolerance: covers backends where the default matmul path rounds
    # operands to bf16; a semantically wrong kernel would be off by >0.1.
    assert jnp.allclose(loss, ref, atol=1e-2, rtol=1e-2), (loss, ref)

    print("KERNEL_OK")
</pallas_src>

<mosaic_0001>
module attributes {stable_mosaic.version = 11 : i64} {
  func.func @kernel(%arg0: i32, %arg1: i32, %arg2: memref<8x128xf32, #tpu.memory_space<vmem>>, %arg3: memref<8x128xf32, #tpu.memory_space<vmem>>, %arg4: memref<8x1xf32, #tpu.memory_space<vmem>>, %arg5: memref<8x1xf32, #tpu.memory_space<vmem>>, %arg6: memref<8x1xf32, #tpu.memory_space<vmem>>, %arg7: memref<8x1xf32, #tpu.memory_space<vmem>>) attributes {dimension_semantics = [#tpu.dimension_semantics<parallel>, #tpu.dimension_semantics<arbitrary>], iteration_bounds = array<i64: 1, 1>, scalar_prefetch = 0 : i64, scratch_operands = 3 : i64, tpu.core_type = #tpu.core_type<tc>, window_params = [{transform_indices = @transform_0, window_bounds = array<i64: 8, 128>}, {pipeline_mode = #tpu.pipeline_mode<synchronous>, transform_indices = @transform_1, window_bounds = array<i64: 8, 128>}, {transform_indices = @transform_2, window_bounds = array<i64: 8, 1>}]} {
    %c0_i32 = arith.constant 0 : i32
    %0 = arith.cmpi eq, %arg1, %c0_i32 : i32
    %1 = arith.extui %0 : i1 to i32
    %c0_i32_0 = arith.constant 0 : i32
    %2 = arith.cmpi ne, %1, %c0_i32_0 : i32
    scf.if %2 {
      %cst_16 = arith.constant -1.000000e+30 : f32
      %31 = vector.broadcast %cst_16 : f32 to vector<8x1xf32>
      %c0_17 = arith.constant 0 : index
      %c0_18 = arith.constant 0 : index
      %32 = vector.load %arg5[%c0_17, %c0_18] : memref<8x1xf32, #tpu.memory_space<vmem>>, vector<8x1xf32>
      tpu.vector_store %arg5[%c0_17, %c0_18], %31 {strides = array<i32>} : memref<8x1xf32, #tpu.memory_space<vmem>>, vector<8x1xf32>,
      %cst_19 = arith.constant 0.000000e+00 : f32
      %33 = vector.broadcast %cst_19 : f32 to vector<8x1xf32>
      %c0_20 = arith.constant 0 : index
      %c0_21 = arith.constant 0 : index
      %34 = vector.load %arg6[%c0_20, %c0_21] : memref<8x1xf32, #tpu.memory_space<vmem>>, vector<8x1xf32>
      tpu.vector_store %arg6[%c0_20, %c0_21], %33 {strides = array<i32>} : memref<8x1xf32, #tpu.memory_space<vmem>>, vector<8x1xf32>,
      %cst_22 = arith.constant 0.000000e+00 : f32
      %35 = vector.broadcast %cst_22 : f32 to vector<8x1xf32>
      %c0_23 = arith.constant 0 : index
      %c0_24 = arith.constant 0 : index
      %36 = vector.load %arg7[%c0_23, %c0_24] : memref<8x1xf32, #tpu.memory_space<vmem>>, vector<8x1xf32>
      tpu.vector_store %arg7[%c0_23, %c0_24], %35 {strides = array<i32>} : memref<8x1xf32, #tpu.memory_space<vmem>>, vector<8x1xf32>,
    } else {
    }
    %c0 = arith.constant 0 : index
    %c0_1 = arith.constant 0 : index
    %3 = vector.load %arg2[%c0, %c0_1] : memref<8x128xf32, #tpu.memory_space<vmem>>, vector<8x128xf32>
    %c8_i32 = arith.constant 8 : i32
    %4 = arith.muli %arg1, %c8_i32 : i32
    %5 = tpu.assume_multiple %4, 8 : i32
    %6 = arith.index_cast %5 : i32 to index
    %c0_2 = arith.constant 0 : index
    %7 = vector.load %arg3[%6, %c0_2] : memref<8x128xf32, #tpu.memory_space<vmem>>, vector<8x128xf32>
    %cst = arith.constant dense<0.000000e+00> : vector<8x8xf32>
    %8 = tpu.matmul %3, %7, %cst {dimension_numbers = #tpu.dot_dimension_numbers<[1], [1], [0], [0], [0, 0, 1, 0], [], []>} : vector<8x128xf32>, vector<8x128xf32>, vector<8x8xf32> -> vector<8x8xf32>
    %9 = arith.cmpi eq, %arg1, %arg0 : i32
    %10 = arith.extui %9 : i1 to i32
    %c0_i32_3 = arith.constant 0 : i32
    %11 = arith.cmpi ne, %10, %c0_i32_3 : i32
    scf.if %11 {
      %31 = tpu.iota {dimensions = array<i32: 0>} : vector<8x8xi32>
      %32 = tpu.iota {dimensions = array<i32: 1>} : vector<8x8xi32>
      %33 = arith.cmpi eq, %31, %32 : vector<8x8xi32>
      %cst_16 = arith.constant 0.000000e+00 : f32
      %34 = vector.broadcast %cst_16 : f32 to vector<8x8xf32>
      %35 = arith.select %33, %8, %34 : vector<8x8xi1>, vector<8x8xf32>
      %cst_17 = arith.constant dense<0.000000e+00> : vector<8xf32>
      %36 = vector.multi_reduction <add>, %35, %cst_17 [1] : vector<8x8xf32> to vector<8xf32>
      %37 = vector.shape_cast %36 : vector<8xf32> to vector<8x1xf32>
      %c0_18 = arith.constant 0 : index
      %c0_19 = arith.constant 0 : index
      %38 = vector.load %arg7[%c0_18, %c0_19] : memref<8x1xf32, #tpu.memory_space<vmem>>, vector<8x1xf32>
      tpu.vector_store %arg7[%c0_18, %c0_19], %37 {strides = array<i32>} : memref<8x1xf32, #tpu.memory_space<vmem>>, vector<8x1xf32>,
    } else {
    }
    %c0_4 = arith.constant 0 : index
    %c0_5 = arith.constant 0 : index
    %12 = vector.load %arg5[%c0_4, %c0_5] : memref<8x1xf32, #tpu.memory_space<vmem>>, vector<8x1xf32>
    %cst_6 = arith.constant dense<0xFF800000> : vector<8xf32>
    %13 = vector.multi_reduction <maximumf>, %8, %cst_6 [1] : vector<8x8xf32> to vector<8xf32>
    %14 = vector.shape_cast %13 : vector<8xf32> to vector<8x1xf32>
    %15 = arith.maximumf %12, %14 : vector<8x1xf32>
    %c0_7 = arith.constant 0 : index
    %c0_8 = arith.constant 0 : index
    %16 = vector.load %arg6[%c0_7, %c0_8] : memref<8x1xf32, #tpu.memory_space<vmem>>, vector<8x1xf32>
    %17 = arith.subf %12, %15 : vector<8x1xf32>
    %18 = math.exp %17 : vector<8x1xf32>
    %19 = arith.mulf %16, %18 : vector<8x1xf32>
    %20 = vector.broadcast %15 : vector<8x1xf32> to vector<8x8xf32>
    %21 = arith.subf %8, %20 : vector<8x8xf32>
    %22 = math.exp %21 : vector<8x8xf32>
    %cst_9 = arith.constant dense<0.000000e+00> : vector<8xf32>
    %23 = vector.multi_reduction <add>, %22, %cst_9 [1] : vector<8x8xf32> to vector<8xf32>
    %24 = vector.shape_cast %23 : vector<8xf32> to vector<8x1xf32>
    %25 = arith.addf %19, %24 : vector<8x1xf32>
    %c0_10 = arith.constant 0 : index
    %c0_11 = arith.constant 0 : index
    %26 = vector.load %arg6[%c0_10, %c0_11] : memref<8x1xf32, #tpu.memory_space<vmem>>, vector<8x1xf32>
    tpu.vector_store %arg6[%c0_10, %c0_11], %25 {strides = array<i32>} : memref<8x1xf32, #tpu.memory_space<vmem>>, vector<8x1xf32>,
    %c0_12 = arith.constant 0 : index
    %c0_13 = arith.constant 0 : index
    %27 = vector.load %arg5[%c0_12, %c0_13] : memref<8x1xf32, #tpu.memory_space<vmem>>, vector<8x1xf32>
    tpu.vector_store %arg5[%c0_12, %c0_13], %15 {strides = array<i32>} : memref<8x1xf32, #tpu.memory_space<vmem>>, vector<8x1xf32>,
    %c0_i32_14 = arith.constant 0 : i32
    %28 = arith.cmpi eq, %arg1, %c0_i32_14 : i32
    %29 = arith.extui %28 : i1 to i32
    %c0_i32_15 = arith.constant 0 : i32
    %30 = arith.cmpi ne, %29, %c0_i32_15 : i32
    scf.if %30 {
      %c0_16 = arith.constant 0 : index
      %c0_17 = arith.constant 0 : index
      %31 = vector.load %arg5[%c0_16, %c0_17] : memref<8x1xf32, #tpu.memory_space<vmem>>, vector<8x1xf32>
      %c0_18 = arith.constant 0 : index
      %c0_19 = arith.constant 0 : index
      %32 = vector.load %arg6[%c0_18, %c0_19] : memref<8x1xf32, #tpu.memory_space<vmem>>, vector<8x1xf32>
      %33 = math.log %32 : vector<8x1xf32>
      %34 = arith.addf %31, %33 : vector<8x1xf32>
      %c0_20 = arith.constant 0 : index
      %c0_21 = arith.constant 0 : index
      %35 = vector.load %arg7[%c0_20, %c0_21] : memref<8x1xf32, #tpu.memory_space<vmem>>, vector<8x1xf32>
      %36 = arith.subf %34, %35 : vector<8x1xf32>
      %c0_22 = arith.constant 0 : index
      %c0_23 = arith.constant 0 : index
      %37 = vector.load %arg4[%c0_22, %c0_23] : memref<8x1xf32, #tpu.memory_space<vmem>>, vector<8x1xf32>
      tpu.vector_store %arg4[%c0_22, %c0_23], %36 {strides = array<i32>} : memref<8x1xf32, #tpu.memory_space<vmem>>, vector<8x1xf32>,
    } else {
    }
    return
  }
  func.func @transform_0(%arg0: i32, %arg1: i32) -> (i32, i32) {
    %c0_i32 = arith.constant 0 : i32
    %c0_i32_0 = arith.constant 0 : i32
    return %arg0, %c0_i32 : i32, i32
  }
  func.func @transform_1(%arg0: i32, %arg1: i32) -> (i32, i32) {
    %c0_i32 = arith.constant 0 : i32
    %c0_i32_0 = arith.constant 0 : i32
    %c0_i32_1 = arith.constant 0 : i32
    return %c0_i32, %c0_i32_0 : i32, i32
  }
  func.func @transform_2(%arg0: i32, %arg1: i32) -> (i32, i32) {
    %c0_i32 = arith.constant 0 : i32
    %c0_i32_0 = arith.constant 0 : i32
    return %arg0, %c0_i32 : i32, i32
  }
}

</mosaic_0001>

<llo_original>
// kernel: tpu_custom_call.1
$region0: #{tpu_custom_call.1}
  #allocation0 [shape = 'u32[]', space=smem, size = 0x4, offset = 0x4, fixed_abs, tag = 'smem constant byte address 0x4 - core index']
  #allocation1 [shape = 'u32[144,128]{1,0:T(1,128)}', space=vmem, size = 0x12000, scoped, tag = 'internal scratch']
  #allocation2 [shape = 'f32[8,1]{1,0:T(8,128)}', space=vmem, size = 0x1000, scoped, tag = 'scratch operand']
  #allocation3 [shape = 'f32[8,1]{1,0:T(8,128)}', space=vmem, size = 0x1000, scoped, tag = 'scratch operand']
  #allocation4 [shape = 'f32[8,1]{1,0:T(8,128)}', space=vmem, size = 0x1000, scoped, tag = 'scratch operand']
  %s0 = inlined_call_operand.hbm [shape: f32[8,128], index: 0, kind: input, shape index: {}]
  %s1 = inlined_call_operand.hbm [shape: f32[8,128], index: 1, kind: input, shape index: {}]
  %s2 = inlined_call_operand.vmem [shape: f32[8,1], index: 2, kind: output, shape index: {}]
  %s3 = sld [smem:[#allocation0]]
  $region38: #{tpu_custom_call.1} parent=0
    _
  %s5 = ssub.s32 1, %s3
  %s6 = scalar_select 0, %s5, %s3
  $region1: #{tpu_custom_call.1} parent=0
    #allocation5 [shape = 'u8[4096]{0}', space=vmem, size = 0x1000, scoped, tag = 'input window, operand 0, single buffered']
    #allocation6 [shape = 's32[1]{0}', space=sflag, size = 0x4, scoped, tag = 'scoped memory for tpu_custom_call.1']
    #allocation7 [shape = 'u8[4096]{0}', space=vmem, size = 0x1000, scoped, tag = 'input window, operand 1, single buffered']
    #allocation8 [shape = 's32[1]{0}', space=sflag, size = 0x4, scoped, tag = 'scoped memory for tpu_custom_call.1']
    %7 = vsyncpa [#allocation6], 0
    %8 = vsyncpa [#allocation8], 0
    // Predicated region
    $region2: #{tpu_custom_call.1} parent=1 // pred_check
      _
    $region3: #{tpu_custom_call.1} parent=1 // pred_check_branch
      %10 = sbr.rel (0) target = $region5
    $region4: #{tpu_custom_call.1} parent=1 // pred_region
      %s12 = ssub.s32 128, 128
      %13 = vsyncadd [#allocation6], %s12
      %s15 = sshll.u32 [#allocation5], 4
      %s16 = int_to_ptr.vmem [resolvable:$true] %s15
      %18 = dma.hbm_to_vmem [thread:$0]  %s0, 128, %s16, [#allocation6]
    $region5: #{tpu_custom_call.1} parent=1 // pred_fallthru
      _
    // Predicated region
    $region6: #{tpu_custom_call.1} parent=1 // pred_check
      _
    $region7: #{tpu_custom_call.1} parent=1 // pred_check_branch
      %20 = sbr.rel (0) target = $region9
    $region8: #{tpu_custom_call.1} parent=1 // pred_region
      %s22 = ssub.s32 128, 128
      %23 = vsyncadd [#allocation8], %s22
      %s25 = sshll.u32 [#allocation7], 4
      %s26 = int_to_ptr.vmem [resolvable:$true] %s25
      %28 = dma.hbm_to_vmem [thread:$0]  %s1, 128, %s26, [#allocation8]
    $region9: #{tpu_custom_call.1} parent=1 // pred_fallthru
      _
    // Predicated region
    $region10: #{tpu_custom_call.1} parent=1 // pred_check
      _
    $region11: #{tpu_custom_call.1} parent=1 // pred_check_branch
      %30 = sbr.rel (0) target = $region13
    $region12: #{tpu_custom_call.1} parent=1 // pred_region
      %31 = dma.done [#allocation6], 128
    $region13: #{tpu_custom_call.1} parent=1 // pred_fallthru
      _
    // Predicated region
    $region14: #{tpu_custom_call.1} parent=1 // pred_check
      _
    $region15: #{tpu_custom_call.1} parent=1 // pred_check_branch
      %33 = sbr.rel (0) target = $region17
    $region16: #{tpu_custom_call.1} parent=1 // pred_region
      %34 = dma.done [#allocation8], 128
    $region17: #{tpu_custom_call.1} parent=1 // pred_fallthru
      _
    %p35 = scmp.eq.s32.totalorder 0, 0
    // Predicated region
    $region18: #{tpu_custom_call.1} parent=1 // pred_check
      %p36 = pneg %p35
    $region19: #{tpu_custom_call.1} parent=1 // pred_check_branch
      %38 = sbr.rel (%p36) target = $region21
    $region20: #{tpu_custom_call.1} parent=1 // pred_region
      %vm39 = vcmask 7168
      %40 = vst.msk [vmem:[#allocation2] sm:$0xff] %vm39, -1e+30
      %41 = vst.msk [vmem:[#allocation3] sm:$0xff] %vm39, 0.0
      %42 = vst.msk [vmem:[#allocation4] sm:$0xff] %vm39, 0.0
    $region21: #{tpu_custom_call.1} parent=1 // pred_fallthru
      _
    %v43 = vld [vmem:[#allocation5] sm:$0xff]
    %s44 = smul.u32 0, 8
    %s45 = scalar_lea.vmem [#allocation7], %s44
    %v46 = vld [vmem:[%s45] sm:$0xff]
    %47 = vmatprep.subr.mxu0 0.0
    %48 = vmatpush1.xpose.msra.mxu0 %v46
    %49 = vmatprep.subr.mxu0 0.0
    %50 = vmatpush1.xpose.msra.mxu0 0.0
    %51 = vmatprep.subr.mxu0 0.0
    %52 = vmatpush1.xpose.msra.mxu0 0.0
    %53 = vmatprep.subr.mxu0 0.0
    %54 = vmatpush1.xpose.msra.mxu0 0.0
    %55 = vmatprep.subr.mxu0 0.0
    %56 = vmatpush1.xpose.msra.mxu0 0.0
    %57 = vmatprep.subr.mxu0 0.0
    %58 = vmatpush1.xpose.msra.mxu0 0.0
    %59 = vmatprep.subr.mxu0 0.0
    %60 = vmatpush1.xpose.msra.mxu0 0.0
    %61 = vmatprep.subr.mxu0 0.0
    %62 = vmatpush1.xpose.msra.mxu0 0.0
    %63 = vmatprep.subr.mxu0 0.0
    %64 = vmatpush1.xpose.msra.mxu0 0.0
    %65 = vmatprep.subr.mxu0 0.0
    %66 = vmatpush1.xpose.msra.mxu0 0.0
    %67 = vmatprep.subr.mxu0 0.0
    %68 = vmatpush1.xpose.msra.mxu0 0.0
    %69 = vmatprep.subr.mxu0 0.0
    %70 = vmatpush1.xpose.msra.mxu0 0.0
    %71 = vmatprep.subr.mxu0 0.0
    %72 = vmatpush1.xpose.msra.mxu0 0.0
    %73 = vmatprep.subr.mxu0 0.0
    %74 = vmatpush1.xpose.msra.mxu0 0.0
    %75 = vmatprep.subr.mxu0 0.0
    %76 = vmatpush1.xpose.msra.mxu0 0.0
    %77 = vmatprep.subr.mxu0 0.0
    %78 = vmatpush1.xpose.msra.mxu0 0.0
    %79 = vmatprep.subr.mxu0 0.0
    %80 = vmatpush1.xpose.msra.mxu0 0.0
    %81 = vmatprep.subr.mxu0 0.0
    %82 = vmatpush1.xpose.msra.mxu0 0.0
    %83 = vmatprep.subr.mxu0 0.0
    %84 = vmatpush1.xpose.msra.mxu0 0.0
    %85 = vmatprep.subr.mxu0 0.0
    %86 = vmatpush1.xpose.msra.mxu0 0.0
    %87 = vmatprep.subr.mxu0 0.0
    %88 = vmatpush1.xpose.msra.mxu0 0.0
    %89 = vmatprep.subr.mxu0 0.0
    %90 = vmatpush1.xpose.msra.mxu0 0.0
    %91 = vmatprep.subr.mxu0 0.0
    %92 = vmatpush1.xpose.msra.mxu0 0.0
    %93 = vmatprep.subr.mxu0 0.0
    %94 = vmatpush1.xpose.msra.mxu0 0.0
    %95 = vmatprep.subr.mxu0 0.0
    %96 = vmatpush1.xpose.msra.mxu0 0.0
    %97 = vmatprep.subr.mxu0 0.0
    %98 = vmatpush1.xpose.msra.mxu0 0.0
    %99 = vmatprep.subr.mxu0 0.0
    %100 = vmatpush1.xpose.msra.mxu0 0.0
    %101 = vmatprep.subr.mxu0 0.0
    %102 = vmatpush1.xpose.msra.mxu0 0.0
    %103 = vmatprep.subr.mxu0 0.0
    %104 = vmatpush1.xpose.msra.mxu0 0.0
    %105 = vmatprep.subr.mxu0 0.0
    %106 = vmatpush1.xpose.msra.mxu0 0.0
    %107 = vmatprep.subr.mxu0 0.0
    %108 = vmatpush1.xpose.msra.mxu0 0.0
    %109 = vmatprep.subr.mxu0 0.0
    %110 = vmatpush1.xpose.msra.mxu0 0.0
    %111 = vmatprep.mubr.f32.mxu0 0.0
    %112 = vmatmul.mubr.f32.gmra.mrb[0].mxu0 %v43
    %v113 = vpop.f32.mrb[0].mxu0
    %v114 = vadd.f32 0.0, %v113
    %v115 = vpop.f32.mrb[0].mxu0
    %116 = vdwg.mxu0
    %p117 = scmp.eq.s32.totalorder 0, 0
    // Predicated region
    $region22: #{tpu_custom_call.1} parent=1 // pred_check
      %p118 = pneg %p117
    $region23: #{tpu_custom_call.1} parent=1 // pred_check_branch
      %120 = sbr.rel (%p118) target = $region25
    $region24: #{tpu_custom_call.1} parent=1 // pred_region
      %v121 = vlaneseq
      %v122 = vshrl.u32 %v121, 7
      %v123 = vlaneseq
      %v124 = vand.u32 %v123, 127
      %vm125 = vcmp.eq.s32.totalorder %v122, %v124
      %v126 = vsel %vm125, %v114, 0.0
      %vm127 = vcmask 64512
      %v128 = vsel %vm127, %v126, 0.0
      %129 = vadd.xlane.f32.xlu0 %v128
      %v130 = vpop.xlane.xlu0 %129
      %vm131 = vcmask 7168
      %132 = vst.msk [vmem:[#allocation4] sm:$0xff] %vm131, %v130
    $region25: #{tpu_custom_call.1} parent=1 // pred_fallthru
      _
    %v133 = vld [vmem:[#allocation2] sm:$0xff]
    %vm134 = vcmask 64512
    %v135 = vsel %vm134, %v114, -inf
    %136 = vmax.xlane.f32.xlu0 %v135
    %v137 = vpop.xlane.xlu0 %136
    %v138 = vmax.f32 %v133, %v137
    %v139 = vld [vmem:[#allocation3] sm:$0xff]
    %v140 = vsub.f32 %v133, %v138
    %v141 = vmul.f32 %v140, 1.442695
    %v142 = vpow.pop %v141
    %v143 = vmul.f32 %v139, %v142
    %145 = vset.pattern.permute.xlu0 0
    %146 = vperm.xlu0 %145, %v138
    %v147 = vpop.permute.xlu0 %146
    %v149 = vsub.f32 %v114, %v147
    %v150 = vmul.f32 %v149, 1.442695
    %v151 = vpow.pop %v150
    %v152 = vsel %vm134, %v151, 0.0
    %153 = vadd.xlane.f32.xlu0 %v152
    %v154 = vpop.xlane.xlu0 %153
    %v155 = vadd.f32 %v143, %v154
    %vm156 = vcmask 7168
    %157 = vst.msk [vmem:[#allocation3] sm:$0xff] %vm156, %v155
    %158 = vst.msk [vmem:[#allocation2] sm:$0xff] %vm156, %v138
    // Predicated region
    $region26: #{tpu_custom_call.1} parent=1 // pred_check
      %p159 = pneg %p35
    $region27: #{tpu_custom_call.1} parent=1 // pred_check_branch
      %161 = sbr.rel (%p159) target = $region29
    $region28: #{tpu_custom_call.1} parent=1 // pred_region
      %v162 = vld [vmem:[#allocation2] sm:$0xff]
      %v163 = vld [vmem:[#allocation3] sm:$0xff]
      %v164 = vlog2.pop %v163
      %v165 = vmul.f32 %v164, 0.6931472
      %v166 = vadd.f32 %v162, %v165
      %v167 = vld [vmem:[#allocation4] sm:$0xff]
      %v168 = vsub.f32 %v166, %v167
      %169 = vst.msk [vmem:[%s2] sm:$0xff] %vm156, %v168
    $region29: #{tpu_custom_call.1} parent=1 // pred_fallthru
      _
    // Predicated region
    $region30: #{tpu_custom_call.1} parent=1 // pred_check
      _
    $region31: #{tpu_custom_call.1} parent=1 // pred_check_branch
      %171 = sbr.rel (0) target = $region33
    $region32: #{tpu_custom_call.1} parent=1 // pred_region
      _
    $region33: #{tpu_custom_call.1} parent=1 // pred_fallthru
      _
    // Predicated region
    $region34: #{tpu_custom_call.1} parent=1 // pred_check
      _
    $region35: #{tpu_custom_call.1} parent=1 // pred_check_branch
      %173 = sbr.rel (0) target = $region37
    $region36: #{tpu_custom_call.1} parent=1 // pred_region
      _
    $region37: #{tpu_custom_call.1} parent=1 // pred_fallthru
      _
    %174 = vsyncpa [#allocation6], 1
    %175 = vsyncpa [#allocation8], 1

</llo_original>
